<compile_context>
chip_gen: v7x
topology: tpu7x:2x2x1
jax: 0.10.0
libtpu: 0.0.40
codegen_flags: <defaults>
</compile_context>

<pallas_src>
import functools
import math

import numpy as np

import jax
import jax.numpy as jnp
from jax.experimental import pallas as pl
from jax.experimental.pallas import tpu as pltpu


def _gaussian_weights(window_size, sigma=1.5):
    g = [math.exp(-((x - window_size // 2) ** 2) / (2.0 * sigma ** 2))
         for x in range(window_size)]
    s = sum(g)
    return tuple(float(v / s) for v in g)


def _band_matrix(n, weights):
    """Banded matrix M with M[i, j] = w[j - i + p]; A @ x == 'same' conv along
    rows with zero padding, and (weights symmetric) x @ M == 'same' conv along
    columns."""
    win = len(weights)
    p = win // 2
    m = np.zeros((n, n), dtype=np.float32)
    for i in range(n):
        for j in range(n):
            k = j - i + p
            if 0 <= k < win:
                m[i, j] = weights[k]
    return m


def _choose_pack(n_images, width, max_lanes=512):
    """Number of images packed side-by-side along W (lane-dense layout)."""
    divisors = [d for d in range(1, n_images + 1) if n_images % d == 0]
    fitting = [d for d in divisors if d * width <= max_lanes]
    if not fitting:
        return 1
    aligned = [d for d in fitting if (d * width) % 128 == 0]
    return max(aligned) if aligned else max(fitting)


def _ssim_kernel(av_ref, bh_ref, im1_ref, im2_ref, o_ref, s_ref, *, H):
    a = im1_ref[0]          # (H, WL)  LP lane-packed images
    b = im2_ref[0]
    A = av_ref[...]         # (H, H)   vertical band matrix
    Bp = bh_ref[...]        # (WL, WL) block-diagonal horizontal band matrix

    # Fuse the five maps for the horizontal pass: stack along sublanes and do
    # a single MXU matmul against the (block-diagonal) horizontal band matrix.
    s_ref[0 * H:1 * H, :] = a
    s_ref[1 * H:2 * H, :] = b
    s_ref[2 * H:3 * H, :] = a * a
    s_ref[3 * H:4 * H, :] = b * b
    s_ref[4 * H:5 * H, :] = a * b
    hz = jnp.dot(s_ref[...], Bp, preferred_element_type=jnp.float32)  # (5H, WL)

    # Vertical pass: one (H,H) x (H,WL) MXU matmul per map (aligned sublane
    # slices of the fused horizontal result).
    def vpass(m):
        return jnp.dot(A, hz[m * H:(m + 1) * H, :],
                       preferred_element_type=jnp.float32)

    mu1 = vpass(0)
    mu2 = vpass(1)
    e11 = vpass(2)
    e22 = vpass(3)
    e12 = vpass(4)

    mu1_sq = mu1 * mu1
    mu2_sq = mu2 * mu2
    mu1_mu2 = mu1 * mu2
    sigma1_sq = e11 - mu1_sq
    sigma2_sq = e22 - mu2_sq
    sigma12 = e12 - mu1_mu2

    C1 = 0.01 ** 2
    C2 = 0.03 ** 2
    num = (2.0 * mu1_mu2 + C1) * (2.0 * sigma12 + C2)
    den = (mu1_sq + mu2_sq + C1) * (sigma1_sq + sigma2_sq + C2)
    ssim_map = num / den

    # Per-group partial sum; the mean (and cross-group reduction) happens in
    # the wrapper, keeping the grid axis fully parallel.
    o_ref[...] = jnp.reshape(jnp.sum(ssim_map), (1, 1, 1))


def ssim_pallas(im1, im2, window_size=11, size_average=True):
    assert size_average, "only size_average=True is implemented"
    B, C, H, W = im1.shape
    N = B * C
    weights = _gaussian_weights(window_size)

    LP = _choose_pack(N, W)       # images packed along the lane axis
    NG = N // LP                  # grid size (parallel)
    WL = LP * W

    # Constant band matrices (they encode the zero 'same' padding).
    A = jnp.asarray(_band_matrix(H, weights))
    bw = _band_matrix(W, weights)
    bp = np.zeros((WL, WL), dtype=np.float32)
    for g in range(LP):
        bp[g * W:(g + 1) * W, g * W:(g + 1) * W] = bw
    Bp = jnp.asarray(bp)

    def pack(x):
        x = x.astype(jnp.float32).reshape(NG, LP, H, W)
        x = jnp.transpose(x, (0, 2, 1, 3)).reshape(NG, H, WL)
        return x

    im1g = pack(im1)
    im2g = pack(im2)

    kernel = functools.partial(_ssim_kernel, H=H)

    partial_sums = pl.pallas_call(
        kernel,
        out_shape=jax.ShapeDtypeStruct((NG, 1, 1), jnp.float32),
        grid_spec=pltpu.PrefetchScalarGridSpec(
            num_scalar_prefetch=0,
            grid=(NG,),
            in_specs=[
                pl.BlockSpec((H, H), lambda i: (0, 0)),       # A (resident)
                pl.BlockSpec((WL, WL), lambda i: (0, 0)),     # Bp (resident)
                pl.BlockSpec((1, H, WL), lambda i: (i, 0, 0)),
                pl.BlockSpec((1, H, WL), lambda i: (i, 0, 0)),
            ],
            out_specs=pl.BlockSpec((1, 1, 1), lambda i: (i, 0, 0)),
            scratch_shapes=[pltpu.VMEM((5 * H, WL), jnp.float32)],
        ),
        compiler_params=pltpu.CompilerParams(
            dimension_semantics=("parallel",)),
    )(A, Bp, im1g, im2g)

    return jnp.sum(partial_sums) / float(B * C * H * W)


def ssim_ref(im1, im2, window_size=11):
    """Pure-JAX reference mirroring the PyTorch module (depthwise conv2d)."""
    B, C, H, W = im1.shape
    p = window_size // 2
    w1d = jnp.asarray(_gaussian_weights(window_size), dtype=jnp.float32)
    w2d = jnp.outer(w1d, w1d)
    window = jnp.broadcast_to(w2d, (C, 1, window_size, window_size))

    def conv(x):
        return jax.lax.conv_general_dilated(
            x, window, window_strides=(1, 1), padding=[(p, p), (p, p)],
            dimension_numbers=("NCHW", "OIHW", "NCHW"),
            feature_group_count=C)

    im1 = im1.astype(jnp.float32)
    im2 = im2.astype(jnp.float32)
    mu1 = conv(im1)
    mu2 = conv(im2)
    mu1_sq, mu2_sq, mu1_mu2 = mu1 * mu1, mu2 * mu2, mu1 * mu2
    sigma1_sq = conv(im1 * im1) - mu1_sq
    sigma2_sq = conv(im2 * im2) - mu2_sq
    sigma12 = conv(im1 * im2) - mu1_mu2
    C1, C2 = 0.01 ** 2, 0.03 ** 2
    ssim_map = ((2 * mu1_mu2 + C1) * (2 * sigma12 + C2)) / \
               ((mu1_sq + mu2_sq + C1) * (sigma1_sq + sigma2_sq + C2))
    return jnp.mean(ssim_map)


if __name__ == "__main__":
    key = jax.random.PRNGKey(0)
    k1, k2 = jax.random.split(key)
    B, C, H, W = 2, 4, 16, 16
    im1 = jax.random.uniform(k1, (B, C, H, W), dtype=jnp.float32)
    im2 = jax.random.uniform(k2, (B, C, H, W), dtype=jnp.float32)

    out = ssim_pallas(im1, im2, window_size=11, size_average=True)
    out = jax.block_until_ready(out)

    ref = jax.block_until_ready(ssim_ref(im1, im2, window_size=11))
    assert jnp.allclose(out, ref, atol=1e-5, rtol=1e-5), (out, ref)

    print("KERNEL_OK")
</pallas_src>

<mosaic_0001>
module attributes {stable_mosaic.version = 11 : i64} {
  func.func @_ssim_kernel(%arg0: i32, %arg1: memref<16x16xf32, #tpu.memory_space<vmem>>, %arg2: memref<128x128xf32, #tpu.memory_space<vmem>>, %arg3: memref<1x16x128xf32, #tpu.memory_space<vmem>>, %arg4: memref<1x16x128xf32, #tpu.memory_space<vmem>>, %arg5: memref<1x1x1xf32, #tpu.memory_space<vmem>>, %arg6: memref<80x128xf32, #tpu.memory_space<vmem>>) attributes {dimension_semantics = [#tpu.dimension_semantics<parallel>], iteration_bounds = array<i64: 1>, scalar_prefetch = 0 : i64, scratch_operands = 1 : i64, tpu.core_type = #tpu.core_type<tc>, window_params = [{pipeline_mode = #tpu.pipeline_mode<synchronous>, transform_indices = @transform_0, window_bounds = array<i64: 16, 16>}, {pipeline_mode = #tpu.pipeline_mode<synchronous>, transform_indices = @transform_1, window_bounds = array<i64: 128, 128>}, {transform_indices = @transform_2, window_bounds = array<i64: 1, 16, 128>}, {transform_indices = @transform_3, window_bounds = array<i64: 1, 16, 128>}, {transform_indices = @transform_4, window_bounds = array<i64: 1, 1, 1>}]} {
    %c0 = arith.constant 0 : index
    %c0_0 = arith.constant 0 : index
    %c0_1 = arith.constant 0 : index
    %0 = vector.load %arg3[%c0, %c0_0, %c0_1] : memref<1x16x128xf32, #tpu.memory_space<vmem>>, vector<1x16x128xf32>
    %1 = vector.shape_cast %0 : vector<1x16x128xf32> to vector<16x128xf32>
    %c0_2 = arith.constant 0 : index
    %c0_3 = arith.constant 0 : index
    %c0_4 = arith.constant 0 : index
    %2 = vector.load %arg4[%c0_2, %c0_3, %c0_4] : memref<1x16x128xf32, #tpu.memory_space<vmem>>, vector<1x16x128xf32>
    %3 = vector.shape_cast %2 : vector<1x16x128xf32> to vector<16x128xf32>
    %c0_5 = arith.constant 0 : index
    %c0_6 = arith.constant 0 : index
    %4 = vector.load %arg1[%c0_5, %c0_6] : memref<16x16xf32, #tpu.memory_space<vmem>>, vector<16x16xf32>
    %c0_7 = arith.constant 0 : index
    %c0_8 = arith.constant 0 : index
    %5 = vector.load %arg2[%c0_7, %c0_8] : memref<128x128xf32, #tpu.memory_space<vmem>>, vector<128x128xf32>
    %c0_9 = arith.constant 0 : index
    %c0_10 = arith.constant 0 : index
    %6 = vector.load %arg6[%c0_9, %c0_10] : memref<80x128xf32, #tpu.memory_space<vmem>>, vector<16x128xf32>
    tpu.vector_store %arg6[%c0_9, %c0_10], %1 {strides = array<i32>} : memref<80x128xf32, #tpu.memory_space<vmem>>, vector<16x128xf32>,
    %c16 = arith.constant 16 : index
    %c0_11 = arith.constant 0 : index
    %7 = vector.load %arg6[%c16, %c0_11] : memref<80x128xf32, #tpu.memory_space<vmem>>, vector<16x128xf32>
    tpu.vector_store %arg6[%c16, %c0_11], %3 {strides = array<i32>} : memref<80x128xf32, #tpu.memory_space<vmem>>, vector<16x128xf32>,
    %8 = arith.mulf %1, %1 : vector<16x128xf32>
    %c32 = arith.constant 32 : index
    %c0_12 = arith.constant 0 : index
    %9 = vector.load %arg6[%c32, %c0_12] : memref<80x128xf32, #tpu.memory_space<vmem>>, vector<16x128xf32>
    tpu.vector_store %arg6[%c32, %c0_12], %8 {strides = array<i32>} : memref<80x128xf32, #tpu.memory_space<vmem>>, vector<16x128xf32>,
    %10 = arith.mulf %3, %3 : vector<16x128xf32>
    %c48 = arith.constant 48 : index
    %c0_13 = arith.constant 0 : index
    %11 = vector.load %arg6[%c48, %c0_13] : memref<80x128xf32, #tpu.memory_space<vmem>>, vector<16x128xf32>
    tpu.vector_store %arg6[%c48, %c0_13], %10 {strides = array<i32>} : memref<80x128xf32, #tpu.memory_space<vmem>>, vector<16x128xf32>,
    %12 = arith.mulf %1, %3 : vector<16x128xf32>
    %c64 = arith.constant 64 : index
    %c0_14 = arith.constant 0 : index
    %13 = vector.load %arg6[%c64, %c0_14] : memref<80x128xf32, #tpu.memory_space<vmem>>, vector<16x128xf32>
    tpu.vector_store %arg6[%c64, %c0_14], %12 {strides = array<i32>} : memref<80x128xf32, #tpu.memory_space<vmem>>, vector<16x128xf32>,
    %c0_15 = arith.constant 0 : index
    %c0_16 = arith.constant 0 : index
    %14 = vector.load %arg6[%c0_15, %c0_16] : memref<80x128xf32, #tpu.memory_space<vmem>>, vector<80x128xf32>
    %cst = arith.constant dense<0.000000e+00> : vector<80x128xf32>
    %15 = tpu.matmul %14, %5, %cst {dimension_numbers = #tpu.dot_dimension_numbers<[1], [0], [0], [1], [0, 0, 1, 1], [], []>} : vector<80x128xf32>, vector<128x128xf32>, vector<80x128xf32> -> vector<80x128xf32>
    %16 = vector.extract_strided_slice %15 {offsets = [0, 0], sizes = [16, 128], strides = [1, 1]} : vector<80x128xf32> to vector<16x128xf32>
    %cst_17 = arith.constant dense<0.000000e+00> : vector<16x128xf32>
    %17 = tpu.matmul %4, %16, %cst_17 {dimension_numbers = #tpu.dot_dimension_numbers<[1], [0], [0], [1], [0, 0, 1, 1], [], []>} : vector<16x16xf32>, vector<16x128xf32>, vector<16x128xf32> -> vector<16x128xf32>
    %18 = vector.extract_strided_slice %15 {offsets = [16, 0], sizes = [16, 128], strides = [1, 1]} : vector<80x128xf32> to vector<16x128xf32>
    %cst_18 = arith.constant dense<0.000000e+00> : vector<16x128xf32>
    %19 = tpu.matmul %4, %18, %cst_18 {dimension_numbers = #tpu.dot_dimension_numbers<[1], [0], [0], [1], [0, 0, 1, 1], [], []>} : vector<16x16xf32>, vector<16x128xf32>, vector<16x128xf32> -> vector<16x128xf32>
    %20 = vector.extract_strided_slice %15 {offsets = [32, 0], sizes = [16, 128], strides = [1, 1]} : vector<80x128xf32> to vector<16x128xf32>
    %cst_19 = arith.constant dense<0.000000e+00> : vector<16x128xf32>
    %21 = tpu.matmul %4, %20, %cst_19 {dimension_numbers = #tpu.dot_dimension_numbers<[1], [0], [0], [1], [0, 0, 1, 1], [], []>} : vector<16x16xf32>, vector<16x128xf32>, vector<16x128xf32> -> vector<16x128xf32>
    %22 = vector.extract_strided_slice %15 {offsets = [48, 0], sizes = [16, 128], strides = [1, 1]} : vector<80x128xf32> to vector<16x128xf32>
    %cst_20 = arith.constant dense<0.000000e+00> : vector<16x128xf32>
    %23 = tpu.matmul %4, %22, %cst_20 {dimension_numbers = #tpu.dot_dimension_numbers<[1], [0], [0], [1], [0, 0, 1, 1], [], []>} : vector<16x16xf32>, vector<16x128xf32>, vector<16x128xf32> -> vector<16x128xf32>
    %24 = vector.extract_strided_slice %15 {offsets = [64, 0], sizes = [16, 128], strides = [1, 1]} : vector<80x128xf32> to vector<16x128xf32>
    %cst_21 = arith.constant dense<0.000000e+00> : vector<16x128xf32>
    %25 = tpu.matmul %4, %24, %cst_21 {dimension_numbers = #tpu.dot_dimension_numbers<[1], [0], [0], [1], [0, 0, 1, 1], [], []>} : vector<16x16xf32>, vector<16x128xf32>, vector<16x128xf32> -> vector<16x128xf32>
    %26 = arith.mulf %17, %17 : vector<16x128xf32>
    %27 = arith.mulf %19, %19 : vector<16x128xf32>
    %28 = arith.mulf %17, %19 : vector<16x128xf32>
    %29 = arith.subf %21, %26 : vector<16x128xf32>
    %30 = arith.subf %23, %27 : vector<16x128xf32>
    %31 = arith.subf %25, %28 : vector<16x128xf32>
    %cst_22 = arith.constant 2.000000e+00 : f32
    %32 = vector.broadcast %cst_22 : f32 to vector<16x128xf32>
    %33 = arith.mulf %32, %28 : vector<16x128xf32>
    %cst_23 = arith.constant 9.99999974E-5 : f32
    %34 = vector.broadcast %cst_23 : f32 to vector<16x128xf32>
    %35 = arith.addf %33, %34 : vector<16x128xf32>
    %cst_24 = arith.constant 2.000000e+00 : f32
    %36 = vector.broadcast %cst_24 : f32 to vector<16x128xf32>
    %37 = arith.mulf %36, %31 : vector<16x128xf32>
    %cst_25 = arith.constant 8.99999984E-4 : f32
    %38 = vector.broadcast %cst_25 : f32 to vector<16x128xf32>
    %39 = arith.addf %37, %38 : vector<16x128xf32>
    %40 = arith.mulf %35, %39 : vector<16x128xf32>
    %41 = arith.addf %26, %27 : vector<16x128xf32>
    %cst_26 = arith.constant 9.99999974E-5 : f32
    %42 = vector.broadcast %cst_26 : f32 to vector<16x128xf32>
    %43 = arith.addf %41, %42 : vector<16x128xf32>
    %44 = arith.addf %29, %30 : vector<16x128xf32>
    %cst_27 = arith.constant 8.99999984E-4 : f32
    %45 = vector.broadcast %cst_27 : f32 to vector<16x128xf32>
    %46 = arith.addf %44, %45 : vector<16x128xf32>
    %47 = arith.mulf %43, %46 : vector<16x128xf32>
    %48 = arith.divf %40, %47 : vector<16x128xf32>
    %49 = vector.shape_cast %48 : vector<16x128xf32> to vector<1x16x128xf32>
    %cst_28 = arith.constant dense<0.000000e+00> : vector<1xf32>
    %50 = vector.multi_reduction <add>, %49, %cst_28 [1, 2] : vector<1x16x128xf32> to vector<1xf32>
    %51 = vector.shape_cast %50 : vector<1xf32> to vector<1x1x1xf32>
    %52 = vector.extract %51[0, 0, 0] : f32 from vector<1x1x1xf32>
    %53 = vector.broadcast %52 : f32 to vector<1x1x1xf32>
    %c0_29 = arith.constant 0 : index
    %c0_30 = arith.constant 0 : index
    %c0_31 = arith.constant 0 : index
    %54 = vector.load %arg5[%c0_29, %c0_30, %c0_31] : memref<1x1x1xf32, #tpu.memory_space<vmem>>, vector<1x1x1xf32>
    tpu.vector_store %arg5[%c0_29, %c0_30, %c0_31], %53 {strides = array<i32>} : memref<1x1x1xf32, #tpu.memory_space<vmem>>, vector<1x1x1xf32>,
    return
  }
  func.func @transform_0(%arg0: i32) -> (i32, i32) {
    %c0_i32 = arith.constant 0 : i32
    %c0_i32_0 = arith.constant 0 : i32
    %c0_i32_1 = arith.constant 0 : i32
    return %c0_i32, %c0_i32_0 : i32, i32
  }
  func.func @transform_1(%arg0: i32) -> (i32, i32) {
    %c0_i32 = arith.constant 0 : i32
    %c0_i32_0 = arith.constant 0 : i32
    %c0_i32_1 = arith.constant 0 : i32
    return %c0_i32, %c0_i32_0 : i32, i32
  }
  func.func @transform_2(%arg0: i32) -> (i32, i32, i32) {
    %c0_i32 = arith.constant 0 : i32
    %c0_i32_0 = arith.constant 0 : i32
    %c0_i32_1 = arith.constant 0 : i32
    return %arg0, %c0_i32, %c0_i32_0 : i32, i32, i32
  }
  func.func @transform_3(%arg0: i32) -> (i32, i32, i32) {
    %c0_i32 = arith.constant 0 : i32
    %c0_i32_0 = arith.constant 0 : i32
    %c0_i32_1 = arith.constant 0 : i32
    return %arg0, %c0_i32, %c0_i32_0 : i32, i32, i32
  }
  func.func @transform_4(%arg0: i32) -> (i32, i32, i32) {
    %c0_i32 = arith.constant 0 : i32
    %c0_i32_0 = arith.constant 0 : i32
    %c0_i32_1 = arith.constant 0 : i32
    return %arg0, %c0_i32, %c0_i32_0 : i32, i32, i32
  }
}

</mosaic_0001>

<llo_original>
// kernel: tpu_custom_call.1
$region0: #{tpu_custom_call.1}
  #allocation0 [shape = 'u32[]', space=smem, size = 0x4, offset = 0x4, fixed_abs, tag = 'smem constant byte address 0x4 - core index']
  #allocation1 [shape = 'u32[144,128]{1,0:T(1,128)}', space=vmem, size = 0x12000, scoped, tag = 'internal scratch']
  #allocation2 [shape = 'f32[80,128]{1,0:T(8,128)}', space=vmem, size = 0xa000, scoped, tag = 'scratch operand']
  %s0 = inlined_call_operand.hbm [shape: f32[16,16], index: 0, kind: input, shape index: {}]
  %s1 = inlined_call_operand.hbm [shape: f32[128,128], index: 1, kind: input, shape index: {}]
  %s2 = inlined_call_operand.hbm [shape: f32[1,16,128], index: 2, kind: input, shape index: {}]
  %s3 = inlined_call_operand.hbm [shape: f32[1,16,128], index: 3, kind: input, shape index: {}]
  %s4 = inlined_call_operand.hbm [shape: f32[1,1,1], index: 4, kind: output, shape index: {}]
  %s5 = sld [smem:[#allocation0]]
  $region42: #{tpu_custom_call.1} parent=0
    _
  %s7 = ssub.s32 1, %s5
  %s8 = scalar_select 0, %s7, %s5
  $region1: #{tpu_custom_call.1} parent=0
    #allocation3 [shape = 'u8[8192]{0}', space=vmem, size = 0x2000, scoped, tag = 'input window, operand 0, single buffered']
    #allocation4 [shape = 's32[1]{0}', space=sflag, size = 0x4, scoped, tag = 'scoped memory for tpu_custom_call.1']
    #allocation5 [shape = 's32[1]{0}', space=sflag, size = 0x4, scoped, tag = 'scoped memory for tpu_custom_call.1']
    #allocation6 [shape = 'u8[65536]{0}', space=vmem, size = 0x10000, scoped, tag = 'input window, operand 1, single buffered']
    #allocation7 [shape = 's32[1]{0}', space=sflag, size = 0x4, scoped, tag = 'scoped memory for tpu_custom_call.1']
    #allocation8 [shape = 'u8[8192]{0}', space=vmem, size = 0x2000, scoped, tag = 'input window, operand 2, single buffered']
    #allocation9 [shape = 'u8[8192]{0}', space=vmem, size = 0x2000, scoped, tag = 'input window, operand 3, single buffered']
    #allocation10 [shape = 's32[1]{0}', space=sflag, size = 0x4, scoped, tag = 'scoped memory for tpu_custom_call.1']
    #allocation11 [shape = 'u8[512]{0}', space=vmem, size = 0x400, scoped, tag = 'output window, operand 0, single buffered']
    %9 = vsyncpa [#allocation4], 0
    %10 = vsyncpa [#allocation7], 0
    %11 = vsyncpa [#allocation10], 0
    %12 = vsyncpa [#allocation5], 0
    // Predicated region
    $region2: #{tpu_custom_call.1} parent=1 // pred_check
      _
    $region3: #{tpu_custom_call.1} parent=1 // pred_check_branch
      %14 = sbr.rel (0) target = $region5
    $region4: #{tpu_custom_call.1} parent=1 // pred_region
      %s16 = ssub.s32 256, 256
      %17 = vsyncadd [#allocation4], %s16
      %s18 = sshll.u32 [#allocation3], 4
      %s19 = int_to_ptr.vmem [resolvable:$true] %s18
      %24 = dma.hbm_to_vmem [thread:$0]  %s0, 256, %s19, [#allocation4], 128, 128, 8
    $region5: #{tpu_custom_call.1} parent=1 // pred_fallthru
      _
    // Predicated region
    $region6: #{tpu_custom_call.1} parent=1 // pred_check
      _
    $region7: #{tpu_custom_call.1} parent=1 // pred_check_branch
      %26 = sbr.rel (0) target = $region9
    $region8: #{tpu_custom_call.1} parent=1 // pred_region
      %s28 = ssub.s32 2048, 2048
      %29 = vsyncadd [#allocation7], %s28
      %s30 = sshll.u32 [#allocation6], 4
      %s31 = int_to_ptr.vmem [resolvable:$true] %s30
      %36 = dma.hbm_to_vmem [thread:$0]  %s1, 2048, %s31, [#allocation7], 128, 128, 8
    $region9: #{tpu_custom_call.1} parent=1 // pred_fallthru
      _
    // Predicated region
    $region10: #{tpu_custom_call.1} parent=1 // pred_check
      _
    $region11: #{tpu_custom_call.1} parent=1 // pred_check_branch
      %38 = sbr.rel (0) target = $region13
    $region12: #{tpu_custom_call.1} parent=1 // pred_region
      %s40 = ssub.s32 256, 256
      %41 = vsyncadd [#allocation7], %s40
      %s42 = sshll.u32 [#allocation8], 4
      %s43 = int_to_ptr.vmem [resolvable:$true] %s42
      %48 = dma.hbm_to_vmem [thread:$0]  %s2, 256, %s43, [#allocation7], 128, 128, 8
    $region13: #{tpu_custom_call.1} parent=1 // pred_fallthru
      _
    // Predicated region
    $region14: #{tpu_custom_call.1} parent=1 // pred_check
      _
    $region15: #{tpu_custom_call.1} parent=1 // pred_check_branch
      %50 = sbr.rel (0) target = $region17
    $region16: #{tpu_custom_call.1} parent=1 // pred_region
      %s52 = ssub.s32 256, 256
      %53 = vsyncadd [#allocation10], %s52
      %s54 = sshll.u32 [#allocation9], 4
      %s55 = int_to_ptr.vmem [resolvable:$true] %s54
      %60 = dma.hbm_to_vmem [thread:$0]  %s3, 256, %s55, [#allocation10], 128, 128, 8
    $region17: #{tpu_custom_call.1} parent=1 // pred_fallthru
      _
    // Predicated region
    $region18: #{tpu_custom_call.1} parent=1 // pred_check
      _
    $region19: #{tpu_custom_call.1} parent=1 // pred_check_branch
      %62 = sbr.rel (0) target = $region21
    $region20: #{tpu_custom_call.1} parent=1 // pred_region
      %63 = dma.done [#allocation4], 256
    $region21: #{tpu_custom_call.1} parent=1 // pred_fallthru
      _
    // Predicated region
    $region22: #{tpu_custom_call.1} parent=1 // pred_check
      _
    $region23: #{tpu_custom_call.1} parent=1 // pred_check_branch
      %65 = sbr.rel (0) target = $region25
    $region24: #{tpu_custom_call.1} parent=1 // pred_region
      %66 = dma.done [#allocation7], 2048
    $region25: #{tpu_custom_call.1} parent=1 // pred_fallthru
      _
    // Predicated region
    $region26: #{tpu_custom_call.1} parent=1 // pred_check
      _
    $region27: #{tpu_custom_call.1} parent=1 // pred_check_branch
      %68 = sbr.rel (0) target = $region29
    $region28: #{tpu_custom_call.1} parent=1 // pred_region
      %69 = dma.done [#allocation7], 256
    $region29: #{tpu_custom_call.1} parent=1 // pred_fallthru
      _
    // Predicated region
    $region30: #{tpu_custom_call.1} parent=1 // pred_check
      _
    $region31: #{tpu_custom_call.1} parent=1 // pred_check_branch
      %71 = sbr.rel (0) target = $region33
    $region32: #{tpu_custom_call.1} parent=1 // pred_region
      %72 = dma.done [#allocation10], 256
    $region33: #{tpu_custom_call.1} parent=1 // pred_fallthru
      _
    %v73 = vld [vmem:[#allocation8] sm:$0xff]
    %v74 = vld [vmem:[#allocation8 + $0x8] sm:$0xff]
    %v75 = vld [vmem:[#allocation9] sm:$0xff]
    %v76 = vld [vmem:[#allocation9 + $0x8] sm:$0xff]
    %v77 = vld [vmem:[#allocation3] sm:$0xff]
    %v78 = vld [vmem:[#allocation3 + $0x8] sm:$0xff]
    %v79 = vld [vmem:[#allocation6] sm:$0xff]
    %v80 = vld [vmem:[#allocation6 + $0x8] sm:$0xff]
    %v81 = vld [vmem:[#allocation6 + $0x10] sm:$0xff]
    %v82 = vld [vmem:[#allocation6 + $0x18] sm:$0xff]
    %v83 = vld [vmem:[#allocation6 + $0x20] sm:$0xff]
    %v84 = vld [vmem:[#allocation6 + $0x28] sm:$0xff]
    %v85 = vld [vmem:[#allocation6 + $0x30] sm:$0xff]
    %v86 = vld [vmem:[#allocation6 + $0x38] sm:$0xff]
    %v87 = vld [vmem:[#allocation6 + $0x40] sm:$0xff]
    %v88 = vld [vmem:[#allocation6 + $0x48] sm:$0xff]
    %v89 = vld [vmem:[#allocation6 + $0x50] sm:$0xff]
    %v90 = vld [vmem:[#allocation6 + $0x58] sm:$0xff]
    %v91 = vld [vmem:[#allocation6 + $0x60] sm:$0xff]
    %v92 = vld [vmem:[#allocation6 + $0x68] sm:$0xff]
    %v93 = vld [vmem:[#allocation6 + $0x70] sm:$0xff]
    %v94 = vld [vmem:[#allocation6 + $0x78] sm:$0xff]
    %95 = vst [vmem:[#allocation2] sm:$0xff] %v73
    %96 = vst [vmem:[#allocation2 + $0x8] sm:$0xff] %v74
    %97 = vst [vmem:[#allocation2 + $0x10] sm:$0xff] %v75
    %98 = vst [vmem:[#allocation2 + $0x18] sm:$0xff] %v76
    %v99 = vmul.f32 %v73, %v73
    %v100 = vmul.f32 %v74, %v74
    %101 = vst [vmem:[#allocation2 + $0x20] sm:$0xff] %v99
    %102 = vst [vmem:[#allocation2 + $0x28] sm:$0xff] %v100
    %v103 = vmul.f32 %v75, %v75
    %v104 = vmul.f32 %v76, %v76
    %105 = vst [vmem:[#allocation2 + $0x30] sm:$0xff] %v103
    %106 = vst [vmem:[#allocation2 + $0x38] sm:$0xff] %v104
    %v107 = vmul.f32 %v73, %v75
    %v108 = vmul.f32 %v74, %v76
    %109 = vst [vmem:[#allocation2 + $0x40] sm:$0xff] %v107
    %110 = vst [vmem:[#allocation2 + $0x48] sm:$0xff] %v108
    %v111 = vld [vmem:[#allocation2] sm:$0xff]
    %v112 = vld [vmem:[#allocation2 + $0x8] sm:$0xff]
    %v113 = vld [vmem:[#allocation2 + $0x10] sm:$0xff]
    %v114 = vld [vmem:[#allocation2 + $0x18] sm:$0xff]
    %v115 = vld [vmem:[#allocation2 + $0x20] sm:$0xff]
    %v116 = vld [vmem:[#allocation2 + $0x28] sm:$0xff]
    %v117 = vld [vmem:[#allocation2 + $0x30] sm:$0xff]
    %v118 = vld [vmem:[#allocation2 + $0x38] sm:$0xff]
    %v119 = vld [vmem:[#allocation2 + $0x40] sm:$0xff]
    %v120 = vld [vmem:[#allocation2 + $0x48] sm:$0xff]
    %121 = vmatprep.subr.mxu0 0.0
    %122 = vmatpush1.msra.mxu0 %v79
    %123 = vmatprep.subr.mxu0 0.0
    %124 = vmatpush1.msra.mxu0 %v80
    %125 = vmatprep.subr.mxu0 0.0
    %126 = vmatpush1.msra.mxu0 %v81
    %127 = vmatprep.subr.mxu0 0.0
    %128 = vmatpush1.msra.mxu0 %v82
    %129 = vmatprep.subr.mxu0 0.0
    %130 = vmatpush1.msra.mxu0 %v83
    %131 = vmatprep.subr.mxu0 0.0
    %132 = vmatpush1.msra.mxu0 %v84
    %133 = vmatprep.subr.mxu0 0.0
    %134 = vmatpush1.msra.mxu0 %v85
    %135 = vmatprep.subr.mxu0 0.0
    %136 = vmatpush1.msra.mxu0 %v86
    %137 = vmatprep.subr.mxu0 0.0
    %138 = vmatpush1.msra.mxu0 %v87
    %139 = vmatprep.subr.mxu0 0.0
    %140 = vmatpush1.msra.mxu0 %v88
    %141 = vmatprep.subr.mxu0 0.0
    %142 = vmatpush1.msra.mxu0 %v89
    %143 = vmatprep.subr.mxu0 0.0
    %144 = vmatpush1.msra.mxu0 %v90
    %145 = vmatprep.subr.mxu0 0.0
    %146 = vmatpush1.msra.mxu0 %v91
    %147 = vmatprep.subr.mxu0 0.0
    %148 = vmatpush1.msra.mxu0 %v92
    %149 = vmatprep.subr.mxu0 0.0
    %150 = vmatpush1.msra.mxu0 %v93
    %151 = vmatprep.subr.mxu0 0.0
    %152 = vmatpush1.msra.mxu0 %v94
    %153 = vmatprep.subr.mxu0 0.0
    %154 = vmatpush1.msra.mxu0 0.0
    %155 = vmatprep.subr.mxu0 0.0
    %156 = vmatpush1.msra.mxu0 0.0
    %157 = vmatprep.subr.mxu0 0.0
    %158 = vmatpush1.msra.mxu0 0.0
    %159 = vmatprep.subr.mxu0 0.0
    %160 = vmatpush1.msra.mxu0 0.0
    %161 = vmatprep.subr.mxu0 0.0
    %162 = vmatpush1.msra.mxu0 0.0
    %163 = vmatprep.subr.mxu0 0.0
    %164 = vmatpush1.msra.mxu0 0.0
    %165 = vmatprep.subr.mxu0 0.0
    %166 = vmatpush1.msra.mxu0 0.0
    %167 = vmatprep.subr.mxu0 0.0
    %168 = vmatpush1.msra.mxu0 0.0
    %169 = vmatprep.subr.mxu0 0.0
    %170 = vmatpush1.msra.mxu0 0.0
    %171 = vmatprep.subr.mxu0 0.0
    %172 = vmatpush1.msra.mxu0 0.0
    %173 = vmatprep.subr.mxu0 0.0
    %174 = vmatpush1.msra.mxu0 0.0
    %175 = vmatprep.subr.mxu0 0.0
    %176 = vmatpush1.msra.mxu0 0.0
    %177 = vmatprep.subr.mxu0 0.0
    %178 = vmatpush1.msra.mxu0 0.0
    %179 = vmatprep.subr.mxu0 0.0
    %180 = vmatpush1.msra.mxu0 0.0
    %181 = vmatprep.subr.mxu0 0.0
    %182 = vmatpush1.msra.mxu0 0.0
    %183 = vmatprep.subr.mxu0 0.0
    %184 = vmatpush1.msra.mxu0 0.0
    %185 = vmatprep.mubr.f32.mxu0 0.0
    %186 = vmatmul.mubr.f32.gmra.mrb[0].mxu0 %v111
    %v187 = vpop.f32.mrb[0].mxu0
    %v188 = vadd.f32 0.0, %v187
    %v189 = vpop.f32.mrb[0].mxu0
    %190 = vmatprep.mubr.f32.mxu0 0.0
    %191 = vmatmul.mubr.f32.gmra.mrb[0].mxu0 %v112
    %v192 = vpop.f32.mrb[0].mxu0
    %v193 = vadd.f32 0.0, %v192
    %v194 = vpop.f32.mrb[0].mxu0
    %195 = vmatprep.mubr.f32.mxu0 0.0
    %196 = vmatmul.mubr.f32.gmra.mrb[0].mxu0 %v113
    %v197 = vpop.f32.mrb[0].mxu0
    %v198 = vadd.f32 0.0, %v197
    %v199 = vpop.f32.mrb[0].mxu0
    %200 = vmatprep.mubr.f32.mxu0 0.0
    %201 = vmatmul.mubr.f32.gmra.mrb[0].mxu0 %v114
    %v202 = vpop.f32.mrb[0].mxu0
    %v203 = vadd.f32 0.0, %v202
    %v204 = vpop.f32.mrb[0].mxu0
    %205 = vmatprep.mubr.f32.mxu0 0.0
    %206 = vmatmul.mubr.f32.gmra.mrb[0].mxu0 %v115
    %v207 = vpop.f32.mrb[0].mxu0
    %v208 = vadd.f32 0.0, %v207
    %v209 = vpop.f32.mrb[0].mxu0
    %210 = vmatprep.mubr.f32.mxu0 0.0
    %211 = vmatmul.mubr.f32.gmra.mrb[0].mxu0 %v116
    %v212 = vpop.f32.mrb[0].mxu0
    %v213 = vadd.f32 0.0, %v212
    %v214 = vpop.f32.mrb[0].mxu0
    %215 = vmatprep.mubr.f32.mxu0 0.0
    %216 = vmatmul.mubr.f32.gmra.mrb[0].mxu0 %v117
    %v217 = vpop.f32.mrb[0].mxu0
    %v218 = vadd.f32 0.0, %v217
    %v219 = vpop.f32.mrb[0].mxu0
    %220 = vmatprep.mubr.f32.mxu0 0.0
    %221 = vmatmul.mubr.f32.gmra.mrb[0].mxu0 %v118
    %v222 = vpop.f32.mrb[0].mxu0
    %v223 = vadd.f32 0.0, %v222
    %v224 = vpop.f32.mrb[0].mxu0
    %225 = vmatprep.mubr.f32.mxu0 0.0
    %226 = vmatmul.mubr.f32.gmra.mrb[0].mxu0 %v119
    %v227 = vpop.f32.mrb[0].mxu0
    %v228 = vadd.f32 0.0, %v227
    %v229 = vpop.f32.mrb[0].mxu0
    %230 = vmatprep.mubr.f32.mxu0 0.0
    %231 = vmatmul.mubr.f32.gmra.mrb[0].mxu0 %v120
    %v232 = vpop.f32.mrb[0].mxu0
    %v233 = vadd.f32 0.0, %v232
    %v234 = vpop.f32.mrb[0].mxu0
    %235 = vdwg.mxu0
    %vm236 = vcmask 130048
    %v238 = vsel %vm236, %v77, 0
    %v241 = vsel %vm236, %v78, 0
    %243 = vmatprep.subr.mxu0 0.0
    %244 = vmatpush1.msra.mxu0 %v188
    %245 = vmatprep.subr.mxu0 0.0
    %246 = vmatpush1.msra.mxu0 %v193
    %247 = vmatprep.subr.mxu0 0.0
    %248 = vmatpush1.msra.mxu0 0.0
    %249 = vmatprep.subr.mxu0 0.0
    %250 = vmatpush1.msra.mxu0 0.0
    %251 = vmatprep.subr.mxu0 0.0
    %252 = vmatpush1.msra.mxu0 0.0
    %253 = vmatprep.subr.mxu0 0.0
    %254 = vmatpush1.msra.mxu0 0.0
    %255 = vmatprep.subr.mxu0 0.0
    %256 = vmatpush1.msra.mxu0 0.0
    %257 = vmatprep.subr.mxu0 0.0
    %258 = vmatpush1.msra.mxu0 0.0
    %259 = vmatprep.subr.mxu0 0.0
    %260 = vmatpush1.msra.mxu0 0.0
    %261 = vmatprep.subr.mxu0 0.0
    %262 = vmatpush1.msra.mxu0 0.0
    %263 = vmatprep.subr.mxu0 0.0
    %264 = vmatpush1.msra.mxu0 0.0
    %265 = vmatprep.subr.mxu0 0.0
    %266 = vmatpush1.msra.mxu0 0.0
    %267 = vmatprep.subr.mxu0 0.0
    %268 = vmatpush1.msra.mxu0 0.0
    %269 = vmatprep.subr.mxu0 0.0
    %270 = vmatpush1.msra.mxu0 0.0
    %271 = vmatprep.subr.mxu0 0.0
    %272 = vmatpush1.msra.mxu0 0.0
    %273 = vmatprep.subr.mxu0 0.0
    %274 = vmatpush1.msra.mxu0 0.0
    %275 = vmatprep.subr.mxu0 0.0
    %276 = vmatpush1.msra.mxu0 0.0
    %277 = vmatprep.subr.mxu0 0.0
    %278 = vmatpush1.msra.mxu0 0.0
    %279 = vmatprep.subr.mxu0 0.0
    %280 = vmatpush1.msra.mxu0 0.0
    %281 = vmatprep.subr.mxu0 0.0
    %282 = vmatpush1.msra.mxu0 0.0
    %283 = vmatprep.subr.mxu0 0.0
    %284 = vmatpush1.msra.mxu0 0.0
    %285 = vmatprep.subr.mxu0 0.0
    %286 = vmatpush1.msra.mxu0 0.0
    %287 = vmatprep.subr.mxu0 0.0
    %288 = vmatpush1.msra.mxu0 0.0
    %289 = vmatprep.subr.mxu0 0.0
    %290 = vmatpush1.msra.mxu0 0.0
    %291 = vmatprep.subr.mxu0 0.0
    %292 = vmatpush1.msra.mxu0 0.0
    %293 = vmatprep.subr.mxu0 0.0
    %294 = vmatpush1.msra.mxu0 0.0
    %295 = vmatprep.subr.mxu0 0.0
    %296 = vmatpush1.msra.mxu0 0.0
    %297 = vmatprep.subr.mxu0 0.0
    %298 = vmatpush1.msra.mxu0 0.0
    %299 = vmatprep.subr.mxu0 0.0
    %300 = vmatpush1.msra.mxu0 0.0
    %301 = vmatprep.subr.mxu0 0.0
    %302 = vmatpush1.msra.mxu0 0.0
    %303 = vmatprep.subr.mxu0 0.0
    %304 = vmatpush1.msra.mxu0 0.0
    %305 = vmatprep.subr.mxu0 0.0
    %306 = vmatpush1.msra.mxu0 0.0
    %307 = vmatprep.mubr.f32.mxu0 0.0
    %308 = vmatmul.mubr.f32.gmra.mrb[0].mxu0 %v238
    %v309 = vpop.f32.mrb[0].mxu0
    %v310 = vadd.f32 0.0, %v309
    %v311 = vpop.f32.mrb[0].mxu0
    %312 = vmatprep.mubr.f32.mxu0 0.0
    %313 = vmatmul.mubr.f32.gmra.mrb[0].mxu0 %v241
    %v314 = vpop.f32.mrb[0].mxu0
    %v315 = vadd.f32 0.0, %v314
    %v316 = vpop.f32.mrb[0].mxu0
    %317 = vdwg.mxu0
    %318 = vmatprep.subr.mxu0 0.0
    %319 = vmatpush1.msra.mxu0 %v198
    %320 = vmatprep.subr.mxu0 0.0
    %321 = vmatpush1.msra.mxu0 %v203
    %322 = vmatprep.subr.mxu0 0.0
    %323 = vmatpush1.msra.mxu0 0.0
    %324 = vmatprep.subr.mxu0 0.0
    %325 = vmatpush1.msra.mxu0 0.0
    %326 = vmatprep.subr.mxu0 0.0
    %327 = vmatpush1.msra.mxu0 0.0
    %328 = vmatprep.subr.mxu0 0.0
    %329 = vmatpush1.msra.mxu0 0.0
    %330 = vmatprep.subr.mxu0 0.0
    %331 = vmatpush1.msra.mxu0 0.0
    %332 = vmatprep.subr.mxu0 0.0
    %333 = vmatpush1.msra.mxu0 0.0
    %334 = vmatprep.subr.mxu0 0.0
    %335 = vmatpush1.msra.mxu0 0.0
    %336 = vmatprep.subr.mxu0 0.0
    %337 = vmatpush1.msra.mxu0 0.0
    %338 = vmatprep.subr.mxu0 0.0
    %339 = vmatpush1.msra.mxu0 0.0
    %340 = vmatprep.subr.mxu0 0.0
    %341 = vmatpush1.msra.mxu0 0.0
    %342 = vmatprep.subr.mxu0 0.0
    %343 = vmatpush1.msra.mxu0 0.0
    %344 = vmatprep.subr.mxu0 0.0
    %345 = vmatpush1.msra.mxu0 0.0
    %346 = vmatprep.subr.mxu0 0.0
    %347 = vmatpush1.msra.mxu0 0.0
    %348 = vmatprep.subr.mxu0 0.0
    %349 = vmatpush1.msra.mxu0 0.0
    %350 = vmatprep.subr.mxu0 0.0
    %351 = vmatpush1.msra.mxu0 0.0
    %352 = vmatprep.subr.mxu0 0.0
    %353 = vmatpush1.msra.mxu0 0.0
    %354 = vmatprep.subr.mxu0 0.0
    %355 = vmatpush1.msra.mxu0 0.0
    %356 = vmatprep.subr.mxu0 0.0
    %357 = vmatpush1.msra.mxu0 0.0
    %358 = vmatprep.subr.mxu0 0.0
    %359 = vmatpush1.msra.mxu0 0.0
    %360 = vmatprep.subr.mxu0 0.0
    %361 = vmatpush1.msra.mxu0 0.0
    %362 = vmatprep.subr.mxu0 0.0
    %363 = vmatpush1.msra.mxu0 0.0
    %364 = vmatprep.subr.mxu0 0.0
    %365 = vmatpush1.msra.mxu0 0.0
    %366 = vmatprep.subr.mxu0 0.0
    %367 = vmatpush1.msra.mxu0 0.0
    %368 = vmatprep.subr.mxu0 0.0
    %369 = vmatpush1.msra.mxu0 0.0
    %370 = vmatprep.subr.mxu0 0.0
    %371 = vmatpush1.msra.mxu0 0.0
    %372 = vmatprep.subr.mxu0 0.0
    %373 = vmatpush1.msra.mxu0 0.0
    %374 = vmatprep.subr.mxu0 0.0
    %375 = vmatpush1.msra.mxu0 0.0
    %376 = vmatprep.subr.mxu0 0.0
    %377 = vmatpush1.msra.mxu0 0.0
    %378 = vmatprep.subr.mxu0 0.0
    %379 = vmatpush1.msra.mxu0 0.0
    %380 = vmatprep.subr.mxu0 0.0
    %381 = vmatpush1.msra.mxu0 0.0
    %382 = vmatprep.mubr.f32.mxu0 0.0
    %383 = vmatmul.mubr.f32.gmra.mrb[0].mxu0 %v238
    %v384 = vpop.f32.mrb[0].mxu0
    %v385 = vadd.f32 0.0, %v384
    %v386 = vpop.f32.mrb[0].mxu0
    %387 = vmatprep.mubr.f32.mxu0 0.0
    %388 = vmatmul.mubr.f32.gmra.mrb[0].mxu0 %v241
    %v389 = vpop.f32.mrb[0].mxu0
    %v390 = vadd.f32 0.0, %v389
    %v391 = vpop.f32.mrb[0].mxu0
    %392 = vdwg.mxu0
    %393 = vmatprep.subr.mxu0 0.0
    %394 = vmatpush1.msra.mxu0 %v208
    %395 = vmatprep.subr.mxu0 0.0
    %396 = vmatpush1.msra.mxu0 %v213
    %397 = vmatprep.subr.mxu0 0.0
    %398 = vmatpush1.msra.mxu0 0.0
    %399 = vmatprep.subr.mxu0 0.0
    %400 = vmatpush1.msra.mxu0 0.0
    %401 = vmatprep.subr.mxu0 0.0
    %402 = vmatpush1.msra.mxu0 0.0
    %403 = vmatprep.subr.mxu0 0.0
    %404 = vmatpush1.msra.mxu0 0.0
    %405 = vmatprep.subr.mxu0 0.0
    %406 = vmatpush1.msra.mxu0 0.0
    %407 = vmatprep.subr.mxu0 0.0
    %408 = vmatpush1.msra.mxu0 0.0
    %409 = vmatprep.subr.mxu0 0.0
    %410 = vmatpush1.msra.mxu0 0.0
    %411 = vmatprep.subr.mxu0 0.0
    %412 = vmatpush1.msra.mxu0 0.0
    %413 = vmatprep.subr.mxu0 0.0
    %414 = vmatpush1.msra.mxu0 0.0
    %415 = vmatprep.subr.mxu0 0.0
    %416 = vmatpush1.msra.mxu0 0.0
    %417 = vmatprep.subr.mxu0 0.0
    %418 = vmatpush1.msra.mxu0 0.0
    %419 = vmatprep.subr.mxu0 0.0
    %420 = vmatpush1.msra.mxu0 0.0
    %421 = vmatprep.subr.mxu0 0.0
    %422 = vmatpush1.msra.mxu0 0.0
    %423 = vmatprep.subr.mxu0 0.0
    %424 = vmatpush1.msra.mxu0 0.0
    %425 = vmatprep.subr.mxu0 0.0
    %426 = vmatpush1.msra.mxu0 0.0
    %427 = vmatprep.subr.mxu0 0.0
    %428 = vmatpush1.msra.mxu0 0.0
    %429 = vmatprep.subr.mxu0 0.0
    %430 = vmatpush1.msra.mxu0 0.0
    %431 = vmatprep.subr.mxu0 0.0
    %432 = vmatpush1.msra.mxu0 0.0
    %433 = vmatprep.subr.mxu0 0.0
    %434 = vmatpush1.msra.mxu0 0.0
    %435 = vmatprep.subr.mxu0 0.0
    %436 = vmatpush1.msra.mxu0 0.0
    %437 = vmatprep.subr.mxu0 0.0
    %438 = vmatpush1.msra.mxu0 0.0
    %439 = vmatprep.subr.mxu0 0.0
    %440 = vmatpush1.msra.mxu0 0.0
    %441 = vmatprep.subr.mxu0 0.0
    %442 = vmatpush1.msra.mxu0 0.0
    %443 = vmatprep.subr.mxu0 0.0
    %444 = vmatpush1.msra.mxu0 0.0
    %445 = vmatprep.subr.mxu0 0.0
    %446 = vmatpush1.msra.mxu0 0.0
    %447 = vmatprep.subr.mxu0 0.0
    %448 = vmatpush1.msra.mxu0 0.0
    %449 = vmatprep.subr.mxu0 0.0
    %450 = vmatpush1.msra.mxu0 0.0
    %451 = vmatprep.subr.mxu0 0.0
    %452 = vmatpush1.msra.mxu0 0.0
    %453 = vmatprep.subr.mxu0 0.0
    %454 = vmatpush1.msra.mxu0 0.0
    %455 = vmatprep.subr.mxu0 0.0
    %456 = vmatpush1.msra.mxu0 0.0
    %457 = vmatprep.mubr.f32.mxu0 0.0
    %458 = vmatmul.mubr.f32.gmra.mrb[0].mxu0 %v238
    %v459 = vpop.f32.mrb[0].mxu0
    %v460 = vadd.f32 0.0, %v459
    %v461 = vpop.f32.mrb[0].mxu0
    %462 = vmatprep.mubr.f32.mxu0 0.0
    %463 = vmatmul.mubr.f32.gmra.mrb[0].mxu0 %v241
    %v464 = vpop.f32.mrb[0].mxu0
    %v465 = vadd.f32 0.0, %v464
    %v466 = vpop.f32.mrb[0].mxu0
    %467 = vdwg.mxu0
    %468 = vmatprep.subr.mxu0 0.0
    %469 = vmatpush1.msra.mxu0 %v218
    %470 = vmatprep.subr.mxu0 0.0
    %471 = vmatpush1.msra.mxu0 %v223
    %472 = vmatprep.subr.mxu0 0.0
    %473 = vmatpush1.msra.mxu0 0.0
    %474 = vmatprep.subr.mxu0 0.0
    %475 = vmatpush1.msra.mxu0 0.0
    %476 = vmatprep.subr.mxu0 0.0
    %477 = vmatpush1.msra.mxu0 0.0
    %478 = vmatprep.subr.mxu0 0.0
    %479 = vmatpush1.msra.mxu0 0.0
    %480 = vmatprep.subr.mxu0 0.0
    %481 = vmatpush1.msra.mxu0 0.0
    %482 = vmatprep.subr.mxu0 0.0
    %483 = vmatpush1.msra.mxu0 0.0
    %484 = vmatprep.subr.mxu0 0.0
    %485 = vmatpush1.msra.mxu0 0.0
    %486 = vmatprep.subr.mxu0 0.0
    %487 = vmatpush1.msra.mxu0 0.0
    %488 = vmatprep.subr.mxu0 0.0
    %489 = vmatpush1.msra.mxu0 0.0
    %490 = vmatprep.subr.mxu0 0.0
    %491 = vmatpush1.msra.mxu0 0.0
    %492 = vmatprep.subr.mxu0 0.0
    %493 = vmatpush1.msra.mxu0 0.0
    %494 = vmatprep.subr.mxu0 0.0
    %495 = vmatpush1.msra.mxu0 0.0
    %496 = vmatprep.subr.mxu0 0.0
    %497 = vmatpush1.msra.mxu0 0.0
    %498 = vmatprep.subr.mxu0 0.0
    %499 = vmatpush1.msra.mxu0 0.0
    %500 = vmatprep.subr.mxu0 0.0
    %501 = vmatpush1.msra.mxu0 0.0
    %502 = vmatprep.subr.mxu0 0.0
    %503 = vmatpush1.msra.mxu0 0.0
    %504 = vmatprep.subr.mxu0 0.0
    %505 = vmatpush1.msra.mxu0 0.0
    %506 = vmatprep.subr.mxu0 0.0
    %507 = vmatpush1.msra.mxu0 0.0
    %508 = vmatprep.subr.mxu0 0.0
    %509 = vmatpush1.msra.mxu0 0.0
    %510 = vmatprep.subr.mxu0 0.0
    %511 = vmatpush1.msra.mxu0 0.0
    %512 = vmatprep.subr.mxu0 0.0
    %513 = vmatpush1.msra.mxu0 0.0
    %514 = vmatprep.subr.mxu0 0.0
    %515 = vmatpush1.msra.mxu0 0.0
    %516 = vmatprep.subr.mxu0 0.0
    %517 = vmatpush1.msra.mxu0 0.0
    %518 = vmatprep.subr.mxu0 0.0
    %519 = vmatpush1.msra.mxu0 0.0
    %520 = vmatprep.subr.mxu0 0.0
    %521 = vmatpush1.msra.mxu0 0.0
    %522 = vmatprep.subr.mxu0 0.0
    %523 = vmatpush1.msra.mxu0 0.0
    %524 = vmatprep.subr.mxu0 0.0
    %525 = vmatpush1.msra.mxu0 0.0
    %526 = vmatprep.subr.mxu0 0.0
    %527 = vmatpush1.msra.mxu0 0.0
    %528 = vmatprep.subr.mxu0 0.0
    %529 = vmatpush1.msra.mxu0 0.0
    %530 = vmatprep.subr.mxu0 0.0
    %531 = vmatpush1.msra.mxu0 0.0
    %532 = vmatprep.mubr.f32.mxu0 0.0
    %533 = vmatmul.mubr.f32.gmra.mrb[0].mxu0 %v238
    %v534 = vpop.f32.mrb[0].mxu0
    %v535 = vadd.f32 0.0, %v534
    %v536 = vpop.f32.mrb[0].mxu0
    %537 = vmatprep.mubr.f32.mxu0 0.0
    %538 = vmatmul.mubr.f32.gmra.mrb[0].mxu0 %v241
    %v539 = vpop.f32.mrb[0].mxu0
    %v540 = vadd.f32 0.0, %v539
    %v541 = vpop.f32.mrb[0].mxu0
    %542 = vdwg.mxu0
    %543 = vmatprep.subr.mxu0 0.0
    %544 = vmatpush1.msra.mxu0 %v228
    %545 = vmatprep.subr.mxu0 0.0
    %546 = vmatpush1.msra.mxu0 %v233
    %547 = vmatprep.subr.mxu0 0.0
    %548 = vmatpush1.msra.mxu0 0.0
    %549 = vmatprep.subr.mxu0 0.0
    %550 = vmatpush1.msra.mxu0 0.0
    %551 = vmatprep.subr.mxu0 0.0
    %552 = vmatpush1.msra.mxu0 0.0
    %553 = vmatprep.subr.mxu0 0.0
    %554 = vmatpush1.msra.mxu0 0.0
    %555 = vmatprep.subr.mxu0 0.0
    %556 = vmatpush1.msra.mxu0 0.0
    %557 = vmatprep.subr.mxu0 0.0
    %558 = vmatpush1.msra.mxu0 0.0
    %559 = vmatprep.subr.mxu0 0.0
    %560 = vmatpush1.msra.mxu0 0.0
    %561 = vmatprep.subr.mxu0 0.0
    %562 = vmatpush1.msra.mxu0 0.0
    %563 = vmatprep.subr.mxu0 0.0
    %564 = vmatpush1.msra.mxu0 0.0
    %565 = vmatprep.subr.mxu0 0.0
    %566 = vmatpush1.msra.mxu0 0.0
    %567 = vmatprep.subr.mxu0 0.0
    %568 = vmatpush1.msra.mxu0 0.0
    %569 = vmatprep.subr.mxu0 0.0
    %570 = vmatpush1.msra.mxu0 0.0
    %571 = vmatprep.subr.mxu0 0.0
    %572 = vmatpush1.msra.mxu0 0.0
    %573 = vmatprep.subr.mxu0 0.0
    %574 = vmatpush1.msra.mxu0 0.0
    %575 = vmatprep.subr.mxu0 0.0
    %576 = vmatpush1.msra.mxu0 0.0
    %577 = vmatprep.subr.mxu0 0.0
    %578 = vmatpush1.msra.mxu0 0.0
    %579 = vmatprep.subr.mxu0 0.0
    %580 = vmatpush1.msra.mxu0 0.0
    %581 = vmatprep.subr.mxu0 0.0
    %582 = vmatpush1.msra.mxu0 0.0
    %583 = vmatprep.subr.mxu0 0.0
    %584 = vmatpush1.msra.mxu0 0.0
    %585 = vmatprep.subr.mxu0 0.0
    %586 = vmatpush1.msra.mxu0 0.0
    %587 = vmatprep.subr.mxu0 0.0
    %588 = vmatpush1.msra.mxu0 0.0
    %589 = vmatprep.subr.mxu0 0.0
    %590 = vmatpush1.msra.mxu0 0.0
    %591 = vmatprep.subr.mxu0 0.0
    %592 = vmatpush1.msra.mxu0 0.0
    %593 = vmatprep.subr.mxu0 0.0
    %594 = vmatpush1.msra.mxu0 0.0
    %595 = vmatprep.subr.mxu0 0.0
    %596 = vmatpush1.msra.mxu0 0.0
    %597 = vmatprep.subr.mxu0 0.0
    %598 = vmatpush1.msra.mxu0 0.0
    %599 = vmatprep.subr.mxu0 0.0
    %600 = vmatpush1.msra.mxu0 0.0
    %601 = vmatprep.subr.mxu0 0.0
    %602 = vmatpush1.msra.mxu0 0.0
    %603 = vmatprep.subr.mxu0 0.0
    %604 = vmatpush1.msra.mxu0 0.0
    %605 = vmatprep.subr.mxu0 0.0
    %606 = vmatpush1.msra.mxu0 0.0
    %607 = vmatprep.mubr.f32.mxu0 0.0
    %608 = vmatmul.mubr.f32.gmra.mrb[0].mxu0 %v238
    %v609 = vpop.f32.mrb[0].mxu0
    %v610 = vadd.f32 0.0, %v609
    %v611 = vpop.f32.mrb[0].mxu0
    %612 = vmatprep.mubr.f32.mxu0 0.0
    %613 = vmatmul.mubr.f32.gmra.mrb[0].mxu0 %v241
    %v614 = vpop.f32.mrb[0].mxu0
    %v615 = vadd.f32 0.0, %v614
    %v616 = vpop.f32.mrb[0].mxu0
    %617 = vdwg.mxu0
    %v618 = vmul.f32 %v310, %v310
    %v619 = vmul.f32 %v315, %v315
    %v620 = vmul.f32 %v385, %v385
    %v621 = vmul.f32 %v390, %v390
    %v622 = vmul.f32 %v310, %v385
    %v623 = vmul.f32 %v315, %v390
    %v624 = vsub.f32 %v460, %v618
    %v625 = vsub.f32 %v465, %v619
    %v626 = vsub.f32 %v535, %v620
    %v627 = vsub.f32 %v540, %v621
    %v628 = vsub.f32 %v610, %v622
    %v629 = vsub.f32 %v615, %v623
    %v630 = vmul.f32 %v622, 2.0
    %v631 = vmul.f32 %v623, 2.0
    %v632 = vadd.f32 %v630, 0.0001
    %v633 = vadd.f32 %v631, 0.0001
    %v634 = vmul.f32 %v628, 2.0
    %v635 = vmul.f32 %v629, 2.0
    %v636 = vadd.f32 %v634, 0.0009
    %v637 = vadd.f32 %v635, 0.0009
    %v638 = vmul.f32 %v632, %v636
    %v639 = vmul.f32 %v633, %v637
    %v640 = vadd.f32 %v618, %v620
    %v641 = vadd.f32 %v619, %v621
    %v642 = vadd.f32 %v640, 0.0001
    %v643 = vadd.f32 %v641, 0.0001
    %v644 = vadd.f32 %v624, %v626
    %v645 = vadd.f32 %v625, %v627
    %v646 = vadd.f32 %v644, 0.0009
    %v647 = vadd.f32 %v645, 0.0009
    %v648 = vmul.f32 %v642, %v646
    %v649 = vmul.f32 %v643, %v647
    %v650 = vrcp.pop %v648
    %v651 = vmul.f32 %v638, %v650
    %v652 = vrcp.pop %v649
    %v653 = vmul.f32 %v639, %v652
    %v654 = vadd.f32 %v651, %v653
    %655 = vadd.xlane.f32.xlu0 %v654
    %v656 = vpop.xlane.xlu0 %655
    %v657 = vrot.slane %v656, 4
    %v658 = vadd.f32 %v656, %v657
    %v659 = vrot.slane %v658, 2
    %v660 = vadd.f32 %v658, %v659
    %v661 = vrot.slane %v660, 1
    %v662 = vadd.f32 %v660, %v661
    %s663 = vtos %v662
    %v664 = vstv %s663
    %vm665 = vcmask 0
    %666 = vst.msk [vmem:[#allocation11] sm:$0x1] %vm665, %v664
    // Predicated region
    $region34: #{tpu_custom_call.1} parent=1 // pred_check
      _
    $region35: #{tpu_custom_call.1} parent=1 // pred_check_branch
      %668 = sbr.rel (0) target = $region37
    $region36: #{tpu_custom_call.1} parent=1 // pred_region
      %s670 = ssub.s32 16, 16
      %671 = vsyncadd [#allocation5], %s670
      %s673 = sshll.u32 [#allocation11], 4
      %s674 = int_to_ptr.vmem [resolvable:$true] %s673
      %676 = dma.vmem_to_hbm [thread:$0]  %s674, 16, %s4, [#allocation5]
    $region37: #{tpu_custom_call.1} parent=1 // pred_fallthru
      _
    // Predicated region
    $region38: #{tpu_custom_call.1} parent=1 // pred_check
      _
    $region39: #{tpu_custom_call.1} parent=1 // pred_check_branch
      %678 = sbr.rel (0) target = $region41
    $region40: #{tpu_custom_call.1} parent=1 // pred_region
      %679 = dma.done [#allocation5], 16
    $region41: #{tpu_custom_call.1} parent=1 // pred_fallthru
      _
    %680 = vsyncpa [#allocation4], 1
    %681 = vsyncpa [#allocation7], 1
    %682 = vsyncpa [#allocation10], 1
    %683 = vsyncpa [#allocation5], 1

</llo_original>
